<compile_context>
chip_gen: v5e
topology: v5e:2x2
jax: 0.10.0
libtpu: 0.0.40
codegen_flags: <defaults>
</compile_context>

<pallas_src>
import jax
import jax.numpy as jnp
from jax.experimental import pallas as pl
from jax.experimental.pallas import tpu as pltpu


def _complex_model3_kernel(x_ref, w_ref, b_ref, cw_ref, cb_ref, o_ref):
    # x_ref: (TB, 10)   w_ref: (10, 3)   b_ref: (1, 3)   o_ref: (TB, 3)
    # fused Linear(10->3)
    z = jnp.dot(x_ref[...], w_ref[...],
                preferred_element_type=jnp.float32) + b_ref[...]
    # ReLU
    z = jnp.maximum(z, 0.0)
    # Conv2d(1,1,1) on the (B,1,3,1) view == scalar affine (cw, cb from SMEM)
    o_ref[...] = cw_ref[0, 0] * z + cb_ref[0, 0]


def fuse_params(params):
    """Hoisted (one-time) fusion of the two Linears: no nonlinearity between them."""
    w1, b1, w2, b2, cw, cb = params
    W = w1 @ w2            # (10, 3)
    b = b1 @ w2 + b2       # (1, 3)
    return (W, b, cw, cb)


def _round_up(n, m):
    return ((n + m - 1) // m) * m


def complex_model3_forward(x, fused_params, tb_max=16384):
    """x: (B, 10) float32 -> (B, 1, 3, 1) float32 (matches PyTorch NCHW).

    tb_max: cap on the batch tile (rows per grid step). 8-16K is plenty on
    v5e/v6e; on v7x a larger cap (or pipeline_mode=pl.Buffered(3) on the x
    spec) can buy a bit more HBM bandwidth if B is huge.
    """
    W, b, cw, cb = fused_params
    B = x.shape[0]

    # Batch tile: large (multi-thousand) but always >= 2 grid steps when
    # possible, so both TensorCores get work on v7x. Rows multiple of 8.
    tb = max(8, min(tb_max, _round_up(pl.cdiv(B, 2), 8)))
    n_tiles = pl.cdiv(B, tb)   # ragged last block handled by Pallas

    out = pl.pallas_call(
        _complex_model3_kernel,
        out_shape=jax.ShapeDtypeStruct((B, 3), jnp.float32),
        grid_spec=pltpu.PrefetchScalarGridSpec(
            num_scalar_prefetch=0,
            grid=(n_tiles,),
            in_specs=[
                # x tile (TB, 10): contiguous TB*40 B DMA per step, no transpose op
                pl.BlockSpec((tb, 10), lambda i: (i, 0)),
                # small fused weights: same block every step (resident in VMEM)
                pl.BlockSpec((10, 3), lambda i: (0, 0)),
                pl.BlockSpec((1, 3), lambda i: (0, 0)),
                # conv scalars in SMEM (scalar path)
                pl.BlockSpec(memory_space=pltpu.MemorySpace.SMEM),
                pl.BlockSpec(memory_space=pltpu.MemorySpace.SMEM),
            ],
            # row-major output block: contiguous TB*12 B region of the (B,3) result
            out_specs=pl.BlockSpec((tb, 3), lambda i: (i, 0)),
        ),
        compiler_params=pltpu.CompilerParams(
            dimension_semantics=("parallel",),
        ),
    )(x, W, b, cw, cb)

    # PyTorch's x.view(B, 1, 3, 1) on the row-major (B, 3) result (metadata-only).
    return out.reshape(B, 1, 3, 1)


def init_params(key):
    """Deterministic init mirroring PyTorch default (uniform +-1/sqrt(fan_in))."""
    k1, k2, k3, k4, k5, k6 = jax.random.split(key, 6)
    lim1 = 1.0 / jnp.sqrt(10.0)
    lim2 = 1.0 / jnp.sqrt(5.0)
    lim3 = 1.0  # Conv2d(1,1,1): fan_in = 1*1*1
    w1 = jax.random.uniform(k1, (10, 5), jnp.float32, -lim1, lim1)
    b1 = jax.random.uniform(k2, (1, 5), jnp.float32, -lim1, lim1)
    w2 = jax.random.uniform(k3, (5, 3), jnp.float32, -lim2, lim2)
    b2 = jax.random.uniform(k4, (1, 3), jnp.float32, -lim2, lim2)
    cw = jax.random.uniform(k5, (1, 1), jnp.float32, -lim3, lim3)
    cb = jax.random.uniform(k6, (1, 1), jnp.float32, -lim3, lim3)
    return (w1, b1, w2, b2, cw, cb)


if __name__ == "__main__":
    key = jax.random.PRNGKey(0)
    pkey, xkey = jax.random.split(key)
    params = init_params(pkey)
    fused = fuse_params(params)          # hoisted out of the per-call forward

    # Small but non-trivial: B not a multiple of the tile -> exercises the
    # ragged last block and the 2-tile (megacore-friendly) grid.
    B = 300
    x = jax.random.normal(xkey, (B, 10), jnp.float32)

    out = complex_model3_forward(x, fused)
    out = jax.block_until_ready(out)

    # Pure-JAX reference with the ORIGINAL (unfused) weights.
    w1, b1, w2, b2, cw, cb = params
    ref = jnp.maximum((x @ w1 + b1) @ w2 + b2, 0.0)
    ref = (cw[0, 0] * ref + cb[0, 0]).reshape(B, 1, 3, 1)

    assert out.shape == (B, 1, 3, 1)
    assert jnp.allclose(out, ref, atol=1e-5, rtol=1e-5)

    print("KERNEL_OK")
</pallas_src>

<mosaic_0001>
module attributes {stable_mosaic.version = 11 : i64} {
  func.func @_complex_model3_kernel(%arg0: i32, %arg1: memref<152x10xf32, #tpu.memory_space<vmem>>, %arg2: memref<10x3xf32, #tpu.memory_space<vmem>>, %arg3: memref<1x3xf32, #tpu.memory_space<vmem>>, %arg4: memref<1x1xf32, #tpu.memory_space<smem>>, %arg5: memref<1x1xf32, #tpu.memory_space<smem>>, %arg6: memref<152x3xf32, #tpu.memory_space<vmem>>) attributes {dimension_semantics = [#tpu.dimension_semantics<parallel>], iteration_bounds = array<i64: 2>, scalar_prefetch = 0 : i64, scratch_operands = 0 : i64, tpu.core_type = #tpu.core_type<tc>, window_params = [{transform_indices = @transform_0, window_bounds = array<i64: 152, 10>}, {pipeline_mode = #tpu.pipeline_mode<synchronous>, transform_indices = @transform_1, window_bounds = array<i64: 10, 3>}, {pipeline_mode = #tpu.pipeline_mode<synchronous>, transform_indices = @transform_2, window_bounds = array<i64: 1, 3>}, {transform_indices = @transform_3, window_bounds = array<i64: 1, 1>}, {transform_indices = @transform_4, window_bounds = array<i64: 1, 1>}, {transform_indices = @transform_5, window_bounds = array<i64: 152, 3>}]} {
    %c0 = arith.constant 0 : index
    %c0_0 = arith.constant 0 : index
    %0 = vector.load %arg1[%c0, %c0_0] : memref<152x10xf32, #tpu.memory_space<vmem>>, vector<152x10xf32>
    %c0_1 = arith.constant 0 : index
    %c0_2 = arith.constant 0 : index
    %1 = vector.load %arg2[%c0_1, %c0_2] : memref<10x3xf32, #tpu.memory_space<vmem>>, vector<10x3xf32>
    %cst = arith.constant dense<0.000000e+00> : vector<152x3xf32>
    %2 = tpu.matmul %0, %1, %cst {dimension_numbers = #tpu.dot_dimension_numbers<[1], [0], [0], [1], [0, 0, 1, 1], [], []>} : vector<152x10xf32>, vector<10x3xf32>, vector<152x3xf32> -> vector<152x3xf32>
    %c0_3 = arith.constant 0 : index
    %c0_4 = arith.constant 0 : index
    %3 = vector.load %arg3[%c0_3, %c0_4] : memref<1x3xf32, #tpu.memory_space<vmem>>, vector<1x3xf32>
    %4 = vector.broadcast %3 : vector<1x3xf32> to vector<152x3xf32>
    %5 = arith.addf %2, %4 : vector<152x3xf32>
    %cst_5 = arith.constant 0.000000e+00 : f32
    %6 = vector.broadcast %cst_5 : f32 to vector<152x3xf32>
    %7 = arith.maximumf %5, %6 : vector<152x3xf32>
    %c0_6 = arith.constant 0 : index
    %c0_7 = arith.constant 0 : index
    %8 = memref.load %arg4[%c0_6, %c0_7] : memref<1x1xf32, #tpu.memory_space<smem>>
    %9 = vector.broadcast %8 : f32 to vector<152x3xf32>
    %10 = arith.mulf %9, %7 : vector<152x3xf32>
    %c0_8 = arith.constant 0 : index
    %c0_9 = arith.constant 0 : index
    %11 = memref.load %arg5[%c0_8, %c0_9] : memref<1x1xf32, #tpu.memory_space<smem>>
    %12 = vector.broadcast %11 : f32 to vector<152x3xf32>
    %13 = arith.addf %10, %12 : vector<152x3xf32>
    %c0_10 = arith.constant 0 : index
    %c0_11 = arith.constant 0 : index
    %14 = vector.load %arg6[%c0_10, %c0_11] : memref<152x3xf32, #tpu.memory_space<vmem>>, vector<152x3xf32>
    tpu.vector_store %arg6[%c0_10, %c0_11], %13 {strides = array<i32>} : memref<152x3xf32, #tpu.memory_space<vmem>>, vector<152x3xf32>,
    return
  }
  func.func @transform_0(%arg0: i32) -> (i32, i32) {
    %c0_i32 = arith.constant 0 : i32
    %c0_i32_0 = arith.constant 0 : i32
    return %arg0, %c0_i32 : i32, i32
  }
  func.func @transform_1(%arg0: i32) -> (i32, i32) {
    %c0_i32 = arith.constant 0 : i32
    %c0_i32_0 = arith.constant 0 : i32
    %c0_i32_1 = arith.constant 0 : i32
    return %c0_i32, %c0_i32_0 : i32, i32
  }
  func.func @transform_2(%arg0: i32) -> (i32, i32) {
    %c0_i32 = arith.constant 0 : i32
    %c0_i32_0 = arith.constant 0 : i32
    %c0_i32_1 = arith.constant 0 : i32
    return %c0_i32, %c0_i32_0 : i32, i32
  }
  func.func @transform_3(%arg0: i32) -> (i32, i32) {
    %c0_i32 = arith.constant 0 : i32
    %c0_i32_0 = arith.constant 0 : i32
    %c0_i32_1 = arith.constant 0 : i32
    return %c0_i32, %c0_i32_0 : i32, i32
  }
  func.func @transform_4(%arg0: i32) -> (i32, i32) {
    %c0_i32 = arith.constant 0 : i32
    %c0_i32_0 = arith.constant 0 : i32
    %c0_i32_1 = arith.constant 0 : i32
    return %c0_i32, %c0_i32_0 : i32, i32
  }
  func.func @transform_5(%arg0: i32) -> (i32, i32) {
    %c0_i32 = arith.constant 0 : i32
    %c0_i32_0 = arith.constant 0 : i32
    return %arg0, %c0_i32 : i32, i32
  }
}

</mosaic_0001>

<llo_original>
// kernel: tpu_custom_call.1
$region0: #{tpu_custom_call.1}
  #allocation0 [shape = 'u32[]', space=smem, size = 0x4, offset = 0x4, fixed_abs, tag = 'smem constant byte address 0x4 - core index']
  #allocation1 [shape = 'u32[72,128]{1,0:T(1,128)}', space=vmem, size = 0x9000, scoped, tag = 'internal scratch']
  #allocation2 [shape = 'f32[1,1]{1,0:T(1,128)S(6)}', space=smem, size = 0x200, scoped, tag = 'scoped memory for tpu_custom_call.1']
  #allocation3 [shape = 'f32[1,1]{1,0:T(1,128)S(6)}', space=smem, size = 0x200, scoped, tag = 'scoped memory for tpu_custom_call.1']
  %s0 = inlined_call_operand.vmem [shape: f32[300,10], index: 0, kind: input, shape index: {}]
  %s1 = inlined_call_operand.vmem [shape: f32[10,3], index: 1, kind: input, shape index: {}]
  %s2 = inlined_call_operand.vmem [shape: f32[1,3], index: 2, kind: input, shape index: {}]
  %s3 = inlined_call_operand.<no memory space> [shape: f32[1,1], index: 3, kind: input, shape index: {}]
  %s4 = inlined_call_operand.<no memory space> [shape: f32[1,1], index: 4, kind: input, shape index: {}]
  %s5 = inlined_call_operand.vmem [shape: f32[300,3], index: 5, kind: output, shape index: {}]
  %s6 = sld [smem:[#allocation0]]
  $region53: #{tpu_custom_call.1} parent=0
    _
  %s8 = ssub.s32 1, %s6
  %s9 = scalar_select 0, %s8, %s6
  %10 = sst [smem:[#allocation2]] %s3
  %11 = sst [smem:[#allocation3]] %s4
  loop: start=0, step=1, limit=4
  $region2: #{tpu_custom_call.1} parent=0 // loop_pre_header
    _
  $region3: #{tpu_custom_call.1} parent=0 // loop_header
    %s13 = sphi 0, %s17
    %p14 = scmp.ge.s32.totalorder %s13, 4
    %s23 = sphi 0, %s25
    %s26 = sphi 0, %s23
    %s27 = sphi 0, %s26
    %s43 = sphi 0, %s27
    %s47 = sphi 0, %s47
    %s49 = sphi 0, %s47
    %s50 = sphi 0, %s49
    %s64 = sphi 0, %s50
    %s68 = sphi 0, %s68
    %s70 = sphi 0, %s68
    %s71 = sphi 0, %s70
    %s85 = sphi 0, %s71
    %s89 = sphi 0, %s89
    %s91 = sphi 0, %s89
    %s92 = sphi 0, %s91
    %s106 = sphi 0, %s92
    %s110 = sphi 0, %s110
    %s112 = sphi 0, %s110
    %s113 = sphi 0, %s112
    %s127 = sphi 0, %s113
    %s133 = sphi 0, %s135
    %s136 = sphi 0, %s133
    %s137 = sphi 0, %s136
    %s153 = sphi 0, %s137
  $region4: #{tpu_custom_call.1} parent=0 // loop_header_branch
    %16 = sbr.rel (%p14) target = $region8
  $region5: #{tpu_custom_call.1} parent=0 // loop_body
    %s18 = ssub.s32 %s13, 1
    %s19 = ssub.s32 %s13, 2
    %s20 = sadd.s32 %s13, 1
    %s21 = ssub.s32 %s13, %s20
    %p22 = scmp.eq.s32.totalorder %s21, 0
    %s24 = sadd.s32 %s23, 1
    %s25 = scalar_select %p22, %s23, %s24
    %p28 = pneg %p22
    %p29 = scmp.eq.s32.totalorder %s13, 1
    %p30 = por %p28, %p29
    %p31 = scmp.ne.s32.totalorder %s23, %s26
    %p32 = scmp.eq.s32.totalorder %s13, 0
    %p33 = por %p31, %p32
    %p34 = scmp.ne.s32.totalorder %s23, %s26
    %p35 = scmp.eq.s32.totalorder %s18, 1
    %p36 = por %p34, %p35
    %p37 = scmp.ne.s32.totalorder %s26, %s27
    %p38 = scmp.eq.s32.totalorder %s18, 0
    %p39 = por %p37, %p38
    %p40 = scmp.ne.s32.totalorder %s26, %s27
    %p41 = scmp.eq.s32.totalorder %s19, 1
    %p42 = por %p40, %p41
    %p44 = scmp.ne.s32.totalorder %s27, %s43
    %p45 = scmp.eq.s32.totalorder %s19, 0
    %p46 = por %p44, %p45
    %s48 = sadd.s32 %s47, 1
    %p51 = scmp.eq.s32.totalorder %s13, 1
    %p52 = scmp.ne.s32.totalorder %s47, %s49
    %p53 = scmp.eq.s32.totalorder %s13, 0
    %p54 = por %p52, %p53
    %p55 = scmp.ne.s32.totalorder %s47, %s49
    %p56 = scmp.eq.s32.totalorder %s18, 1
    %p57 = por %p55, %p56
    %p58 = scmp.ne.s32.totalorder %s49, %s50
    %p59 = scmp.eq.s32.totalorder %s18, 0
    %p60 = por %p58, %p59
    %p61 = scmp.ne.s32.totalorder %s49, %s50
    %p62 = scmp.eq.s32.totalorder %s19, 1
    %p63 = por %p61, %p62
    %p65 = scmp.ne.s32.totalorder %s50, %s64
    %p66 = scmp.eq.s32.totalorder %s19, 0
    %p67 = por %p65, %p66
    %s69 = sadd.s32 %s68, 1
    %p72 = scmp.eq.s32.totalorder %s13, 1
    %p73 = scmp.ne.s32.totalorder %s68, %s70
    %p74 = scmp.eq.s32.totalorder %s13, 0
    %p75 = por %p73, %p74
    %p76 = scmp.ne.s32.totalorder %s68, %s70
    %p77 = scmp.eq.s32.totalorder %s18, 1
    %p78 = por %p76, %p77
    %p79 = scmp.ne.s32.totalorder %s70, %s71
    %p80 = scmp.eq.s32.totalorder %s18, 0
    %p81 = por %p79, %p80
    %p82 = scmp.ne.s32.totalorder %s70, %s71
    %p83 = scmp.eq.s32.totalorder %s19, 1
    %p84 = por %p82, %p83
    %p86 = scmp.ne.s32.totalorder %s71, %s85
    %p87 = scmp.eq.s32.totalorder %s19, 0
    %p88 = por %p86, %p87
    %s90 = sadd.s32 %s89, 1
    %p93 = scmp.eq.s32.totalorder %s13, 1
    %p94 = scmp.ne.s32.totalorder %s89, %s91
    %p95 = scmp.eq.s32.totalorder %s13, 0
    %p96 = por %p94, %p95
    %p97 = scmp.ne.s32.totalorder %s89, %s91
    %p98 = scmp.eq.s32.totalorder %s18, 1
    %p99 = por %p97, %p98
    %p100 = scmp.ne.s32.totalorder %s91, %s92
    %p101 = scmp.eq.s32.totalorder %s18, 0
    %p102 = por %p100, %p101
    %p103 = scmp.ne.s32.totalorder %s91, %s92
    %p104 = scmp.eq.s32.totalorder %s19, 1
    %p105 = por %p103, %p104
    %p107 = scmp.ne.s32.totalorder %s92, %s106
    %p108 = scmp.eq.s32.totalorder %s19, 0
    %p109 = por %p107, %p108
    %s111 = sadd.s32 %s110, 1
    %p114 = scmp.eq.s32.totalorder %s13, 1
    %p115 = scmp.ne.s32.totalorder %s110, %s112
    %p116 = scmp.eq.s32.totalorder %s13, 0
    %p117 = por %p115, %p116
    %p118 = scmp.ne.s32.totalorder %s110, %s112
    %p119 = scmp.eq.s32.totalorder %s18, 1
    %p120 = por %p118, %p119
    %p121 = scmp.ne.s32.totalorder %s112, %s113
    %p122 = scmp.eq.s32.totalorder %s18, 0
    %p123 = por %p121, %p122
    %p124 = scmp.ne.s32.totalorder %s112, %s113
    %p125 = scmp.eq.s32.totalorder %s19, 1
    %p126 = por %p124, %p125
    %p128 = scmp.ne.s32.totalorder %s113, %s127
    %p129 = scmp.eq.s32.totalorder %s19, 0
    %p130 = por %p128, %p129
    %s131 = ssub.s32 %s13, %s20
    %p132 = scmp.eq.s32.totalorder %s131, 0
    %s134 = sadd.s32 %s133, 1
    %s135 = scalar_select %p132, %s133, %s134
    %p138 = pneg %p132
    %p139 = scmp.eq.s32.totalorder %s13, 1
    %p140 = por %p138, %p139
    %p141 = scmp.ne.s32.totalorder %s133, %s136
    %p142 = scmp.eq.s32.totalorder %s13, 0
    %p143 = por %p141, %p142
    %p144 = scmp.ne.s32.totalorder %s133, %s136
    %p145 = scmp.eq.s32.totalorder %s18, 1
    %p146 = por %p144, %p145
    %p147 = scmp.ne.s32.totalorder %s136, %s137
    %p148 = scmp.eq.s32.totalorder %s18, 0
    %p149 = por %p147, %p148
    %p150 = scmp.ne.s32.totalorder %s136, %s137
    %p151 = scmp.eq.s32.totalorder %s19, 1
    %p152 = por %p150, %p151
    %p154 = scmp.ne.s32.totalorder %s137, %s153
    %p155 = scmp.eq.s32.totalorder %s19, 0
    %p156 = por %p154, %p155
    %p157 = scmp.le.s32.totalorder 1, %s13
    %p158 = scmp.lt.s32.totalorder %s13, 3
    %p159 = pnand %p157, %p158
    %p160 = pneg %p159
    // Predicated region
    $region9: #{tpu_custom_call.1} parent=5 // pred_check
      _
    $region10: #{tpu_custom_call.1} parent=5 // pred_check_branch
      %162 = sbr.rel (%p159) target = $region12
    $region11: #{tpu_custom_call.1} parent=5 // pred_region
      %s163 = ssub.s32 %s13, 1
      // Predicated region
      $region13: #{tpu_custom_call.1} parent=11 // pred_check
        %p164 = pneg %p60
      $region14: #{tpu_custom_call.1} parent=11 // pred_check_branch
        %166 = sbr.rel (%p164) target = $region16
      $region15: #{tpu_custom_call.1} parent=11 // pred_region
        _
      $region16: #{tpu_custom_call.1} parent=11 // pred_fallthru
        _
      // Predicated region
      $region17: #{tpu_custom_call.1} parent=11 // pred_check
        %p167 = pneg %p81
      $region18: #{tpu_custom_call.1} parent=11 // pred_check_branch
        %169 = sbr.rel (%p167) target = $region20
      $region19: #{tpu_custom_call.1} parent=11 // pred_region
        _
      $region20: #{tpu_custom_call.1} parent=11 // pred_fallthru
        _
      // Predicated region
      $region21: #{tpu_custom_call.1} parent=11 // pred_check
        %p170 = pneg %p102
      $region22: #{tpu_custom_call.1} parent=11 // pred_check_branch
        %172 = sbr.rel (%p170) target = $region24
      $region23: #{tpu_custom_call.1} parent=11 // pred_region
        _
      $region24: #{tpu_custom_call.1} parent=11 // pred_fallthru
        _
      // Predicated region
      $region25: #{tpu_custom_call.1} parent=11 // pred_check
        %p173 = pneg %p123
      $region26: #{tpu_custom_call.1} parent=11 // pred_check_branch
        %175 = sbr.rel (%p173) target = $region28
      $region27: #{tpu_custom_call.1} parent=11 // pred_region
        _
      $region28: #{tpu_custom_call.1} parent=11 // pred_fallthru
        _
    $region12: #{tpu_custom_call.1} parent=5 // pred_fallthru
      _
    %p176 = scmp.lt.s32.totalorder %s13, 2
    // Predicated region
    $region29: #{tpu_custom_call.1} parent=5 // pred_check
      %p177 = pneg %p176
    $region30: #{tpu_custom_call.1} parent=5 // pred_check_branch
      %179 = sbr.rel (%p177) target = $region32
    $region31: #{tpu_custom_call.1} parent=5 // pred_region
      // Predicated region
      $region33: #{tpu_custom_call.1} parent=31 // pred_check
        %p180 = pneg %p33
      $region34: #{tpu_custom_call.1} parent=31 // pred_check_branch
        %182 = sbr.rel (%p180) target = $region36
      $region35: #{tpu_custom_call.1} parent=31 // pred_region
        %s183 = smul.u32 19, %s13
        %p184 = scmp.lt.s32.totalorder %s183, 37
        %s185 = scalar_select %p184, %s183, 37
        %s186 = smul.addr %s185, 8
        %s187 = scalar_lea.vmem %s0, %s186
        %s188 = smul.u32 19, %s13
      $region36: #{tpu_custom_call.1} parent=31 // pred_fallthru
        _
    $region32: #{tpu_custom_call.1} parent=5 // pred_fallthru
      _
    %p189 = scmp.le.s32.totalorder 1, %s13
    %p190 = scmp.lt.s32.totalorder %s13, 3
    %p191 = pnand %p189, %p190
    %p192 = pneg %p191
    // Predicated region
    $region37: #{tpu_custom_call.1} parent=5 // pred_check
      _
    $region38: #{tpu_custom_call.1} parent=5 // pred_check_branch
      %194 = sbr.rel (%p191) target = $region40
    $region39: #{tpu_custom_call.1} parent=5 // pred_region
      %s195 = ssub.s32 %s13, 1
      %s196 = smul.u32 19, %s18
      %p197 = scmp.lt.s32.totalorder %s196, 37
      %s198 = scalar_select %p197, %s196, 37
      %s199 = smul.addr %s198, 8
      %s200 = scalar_lea.vmem %s0, %s199
      %p201 = pneg %p39
      %p202 = pneg %p36
      %p203 = pneg %p60
      %p204 = pneg %p57
      %p205 = pneg %p81
      %p206 = pneg %p78
      %p207 = pneg %p102
      %p208 = pneg %p99
      %p209 = pneg %p123
      %p210 = pneg %p120
      %p211 = pneg %p149
      %p212 = pneg %p146
      %s213 = smul.u32 19, %s18
      %p214 = scmp.lt.s32.totalorder %s213, 37
      %s215 = scalar_select %p214, %s213, 37
      %s216 = smul.addr %s215, 8
      %s217 = scalar_lea.vmem %s5, %s216
      %s218 = smul.u32 19, %s18
      %p219 = scmp.lt.s32.totalorder %s218, 37
      %s220 = scalar_select %p219, %s218, 37
      %s221 = smul.addr %s220, 8
      %s222 = scalar_lea.vmem %s0, %s221
      %s223 = smul.u32 19, %s18
      %s224 = smul.u32 19, %s18
      %p225 = scmp.lt.s32.totalorder %s224, 37
      %s226 = scalar_select %p225, %s224, 37
      %s227 = smul.addr %s226, 8
      %s228 = scalar_lea.vmem %s5, %s227
      %s229 = smul.u32 19, %s18
      %v230 = vld [vmem:[%s222] sm:$0xff]
      %v231 = vld [vmem:[%s222 + $0x8] sm:$0xff]
      %v232 = vld [vmem:[%s222 + $0x10] sm:$0xff]
      %v233 = vld [vmem:[%s222 + $0x18] sm:$0xff]
      %v234 = vld [vmem:[%s222 + $0x20] sm:$0xff]
      %v235 = vld [vmem:[%s222 + $0x28] sm:$0xff]
      %v236 = vld [vmem:[%s222 + $0x30] sm:$0xff]
      %v237 = vld [vmem:[%s222 + $0x38] sm:$0xff]
      %v238 = vld [vmem:[%s222 + $0x40] sm:$0xff]
      %v239 = vld [vmem:[%s222 + $0x48] sm:$0xff]
      %v240 = vld [vmem:[%s222 + $0x50] sm:$0xff]
      %v241 = vld [vmem:[%s222 + $0x58] sm:$0xff]
      %v242 = vld [vmem:[%s222 + $0x60] sm:$0xff]
      %v243 = vld [vmem:[%s222 + $0x68] sm:$0xff]
      %v244 = vld [vmem:[%s222 + $0x70] sm:$0xff]
      %v245 = vld [vmem:[%s222 + $0x78] sm:$0xff]
      %v246 = vld [vmem:[%s222 + $0x80] sm:$0xff]
      %v247 = vld [vmem:[%s222 + $0x88] sm:$0xff]
      %v248 = vld [vmem:[%s222 + $0x90] sm:$0xff]
      %v249 = vld [vmem:[%s1] sm:$0xff]
      %v250 = vld [vmem:[%s1 + $0x8] sm:$0x3]
      %v251 = vld [vmem:[%s2] sm:$0x1]
      %v253 = vperm.slane %v251, 0
      %vm255 = vcmask 80896
      %v257 = vsel %vm255, %v230, 0
      %v260 = vsel %vm255, %v231, 0
      %v263 = vsel %vm255, %v232, 0
      %v266 = vsel %vm255, %v233, 0
      %v269 = vsel %vm255, %v234, 0
      %v272 = vsel %vm255, %v235, 0
      %v275 = vsel %vm255, %v236, 0
      %v278 = vsel %vm255, %v237, 0
      %v281 = vsel %vm255, %v238, 0
      %v284 = vsel %vm255, %v239, 0
      %v287 = vsel %vm255, %v240, 0
      %v290 = vsel %vm255, %v241, 0
      %v293 = vsel %vm255, %v242, 0
      %v296 = vsel %vm255, %v243, 0
      %v299 = vsel %vm255, %v244, 0
      %v302 = vsel %vm255, %v245, 0
      %v305 = vsel %vm255, %v246, 0
      %v308 = vsel %vm255, %v247, 0
      %v311 = vsel %vm255, %v248, 0
      %vm313 = vcmask 1041408
      %v315 = vsel %vm313, %v250, 0
      %317 = vmatpush.msra.mxu0 0.0
      %318 = vmatpush.msra.mxu0 0.0
      %319 = vmatpush.msra.mxu0 0.0
      %320 = vmatpush.msra.mxu0 0.0
      %321 = vmatpush.msra.mxu0 0.0
      %322 = vmatpush.msra.mxu0 0.0
      %323 = vmatpush.msra.mxu0 0.0
      %324 = vmatpush.msra.mxu0 0.0
      %325 = vmatpush.msra.mxu0 0.0
      %326 = vmatpush.msra.mxu0 0.0
      %327 = vmatpush.msra.mxu0 0.0
      %328 = vmatpush.msra.mxu0 0.0
      %329 = vmatpush.msra.mxu0 0.0
      %330 = vmatpush.msra.mxu0 0.0
      %331 = vmatpush.msra.mxu0 %v315
      %332 = vmatpush.msra.mxu0 %v249
      %333 = vmatmul.f32.gmra.mxu0 %v257
      %v334 = vpop.f32.mrf.mxu0
      %v335 = vadd.f32 %v253, %v334
      %336 = vmatmul.f32.gmra.mxu0 %v260
      %v337 = vpop.f32.mrf.mxu0
      %v338 = vadd.f32 %v253, %v337
      %339 = vmatmul.f32.gmra.mxu0 %v263
      %v340 = vpop.f32.mrf.mxu0
      %v341 = vadd.f32 %v253, %v340
      %342 = vmatmul.f32.gmra.mxu0 %v266
      %v343 = vpop.f32.mrf.mxu0
      %v344 = vadd.f32 %v253, %v343
      %345 = vmatmul.f32.gmra.mxu0 %v269
      %v346 = vpop.f32.mrf.mxu0
      %v347 = vadd.f32 %v253, %v346
      %348 = vmatmul.f32.gmra.mxu0 %v272
      %v349 = vpop.f32.mrf.mxu0
      %v350 = vadd.f32 %v253, %v349
      %351 = vmatmul.f32.gmra.mxu0 %v275
      %v352 = vpop.f32.mrf.mxu0
      %v353 = vadd.f32 %v253, %v352
      %354 = vmatmul.f32.gmra.mxu0 %v278
      %v355 = vpop.f32.mrf.mxu0
      %v356 = vadd.f32 %v253, %v355
      %357 = vmatmul.f32.gmra.mxu0 %v281
      %v358 = vpop.f32.mrf.mxu0
      %v359 = vadd.f32 %v253, %v358
      %360 = vmatmul.f32.gmra.mxu0 %v284
      %v361 = vpop.f32.mrf.mxu0
      %v362 = vadd.f32 %v253, %v361
      %363 = vmatmul.f32.gmra.mxu0 %v287
      %v364 = vpop.f32.mrf.mxu0
      %v365 = vadd.f32 %v253, %v364
      %366 = vmatmul.f32.gmra.mxu0 %v290
      %v367 = vpop.f32.mrf.mxu0
      %v368 = vadd.f32 %v253, %v367
      %369 = vmatmul.f32.gmra.mxu0 %v293
      %v370 = vpop.f32.mrf.mxu0
      %v371 = vadd.f32 %v253, %v370
      %372 = vmatmul.f32.gmra.mxu0 %v296
      %v373 = vpop.f32.mrf.mxu0
      %v374 = vadd.f32 %v253, %v373
      %375 = vmatmul.f32.gmra.mxu0 %v299
      %v376 = vpop.f32.mrf.mxu0
      %v377 = vadd.f32 %v253, %v376
      %378 = vmatmul.f32.gmra.mxu0 %v302
      %v379 = vpop.f32.mrf.mxu0
      %v380 = vadd.f32 %v253, %v379
      %381 = vmatmul.f32.gmra.mxu0 %v305
      %v382 = vpop.f32.mrf.mxu0
      %v383 = vadd.f32 %v253, %v382
      %384 = vmatmul.f32.gmra.mxu0 %v308
      %v385 = vpop.f32.mrf.mxu0
      %v386 = vadd.f32 %v253, %v385
      %387 = vmatmul.f32.gmra.mxu0 %v311
      %v388 = vpop.f32.mrf.mxu0
      %v389 = vadd.f32 %v253, %v388
      %390 = vdwg.mxu0
      %v391 = vmax.f32 %v335, 0.0
      %v392 = vmax.f32 %v338, 0.0
      %v393 = vmax.f32 %v341, 0.0
      %v394 = vmax.f32 %v344, 0.0
      %v395 = vmax.f32 %v347, 0.0
      %v396 = vmax.f32 %v350, 0.0
      %v397 = vmax.f32 %v353, 0.0
      %v398 = vmax.f32 %v356, 0.0
      %v399 = vmax.f32 %v359, 0.0
      %v400 = vmax.f32 %v362, 0.0
      %v401 = vmax.f32 %v365, 0.0
      %v402 = vmax.f32 %v368, 0.0
      %v403 = vmax.f32 %v371, 0.0
      %v404 = vmax.f32 %v374, 0.0
      %v405 = vmax.f32 %v377, 0.0
      %v406 = vmax.f32 %v380, 0.0
      %v407 = vmax.f32 %v383, 0.0
      %v408 = vmax.f32 %v386, 0.0
      %v409 = vmax.f32 %v389, 0.0
      %s410 = sld [smem:[#allocation2]]
      %v411 = vstv %s410
      %v412 = vmul.f32 %v411, %v391
      %v413 = vmul.f32 %v411, %v392
      %v414 = vmul.f32 %v411, %v393
      %v415 = vmul.f32 %v411, %v394
      %v416 = vmul.f32 %v411, %v395
      %v417 = vmul.f32 %v411, %v396
      %v418 = vmul.f32 %v411, %v397
      %v419 = vmul.f32 %v411, %v398
      %v420 = vmul.f32 %v411, %v399
      %v421 = vmul.f32 %v411, %v400
      %v422 = vmul.f32 %v411, %v401
      %v423 = vmul.f32 %v411, %v402
      %v424 = vmul.f32 %v411, %v403
      %v425 = vmul.f32 %v411, %v404
      %v426 = vmul.f32 %v411, %v405
      %v427 = vmul.f32 %v411, %v406
      %v428 = vmul.f32 %v411, %v407
      %v429 = vmul.f32 %v411, %v408
      %v430 = vmul.f32 %v411, %v409
      %s431 = sld [smem:[#allocation3]]
      %v432 = vstv %s431
      %v433 = vadd.f32 %v412, %v432
      %v434 = vadd.f32 %v413, %v432
      %v435 = vadd.f32 %v414, %v432
      %v436 = vadd.f32 %v415, %v432
      %v437 = vadd.f32 %v416, %v432
      %v438 = vadd.f32 %v417, %v432
      %v439 = vadd.f32 %v418, %v432
      %v440 = vadd.f32 %v419, %v432
      %v441 = vadd.f32 %v420, %v432
      %v442 = vadd.f32 %v421, %v432
      %v443 = vadd.f32 %v422, %v432
      %v444 = vadd.f32 %v423, %v432
      %v445 = vadd.f32 %v424, %v432
      %v446 = vadd.f32 %v425, %v432
      %v447 = vadd.f32 %v426, %v432
      %v448 = vadd.f32 %v427, %v432
      %v449 = vadd.f32 %v428, %v432
      %v450 = vadd.f32 %v429, %v432
      %v451 = vadd.f32 %v430, %v432
      %vm452 = vcmask 23552
      %453 = vst.msk [vmem:[%s228] sm:$0xff] %vm452, %v433
      %454 = vst.msk [vmem:[%s228 + $0x8] sm:$0xff] %vm452, %v434
      %455 = vst.msk [vmem:[%s228 + $0x10] sm:$0xff] %vm452, %v435
      %456 = vst.msk [vmem:[%s228 + $0x18] sm:$0xff] %vm452, %v436
      %457 = vst.msk [vmem:[%s228 + $0x20] sm:$0xff] %vm452, %v437
      %458 = vst.msk [vmem:[%s228 + $0x28] sm:$0xff] %vm452, %v438
      %459 = vst.msk [vmem:[%s228 + $0x30] sm:$0xff] %vm452, %v439
      %460 = vst.msk [vmem:[%s228 + $0x38] sm:$0xff] %vm452, %v440
      %461 = vst.msk [vmem:[%s228 + $0x40] sm:$0xff] %vm452, %v441
      %462 = vst.msk [vmem:[%s228 + $0x48] sm:$0xff] %vm452, %v442
      %463 = vst.msk [vmem:[%s228 + $0x50] sm:$0xff] %vm452, %v443
      %464 = vst.msk [vmem:[%s228 + $0x58] sm:$0xff] %vm452, %v444
      %465 = vst.msk [vmem:[%s228 + $0x60] sm:$0xff] %vm452, %v445
      %466 = vst.msk [vmem:[%s228 + $0x68] sm:$0xff] %vm452, %v446
      %467 = vst.msk [vmem:[%s228 + $0x70] sm:$0xff] %vm452, %v447
      %468 = vst.msk [vmem:[%s228 + $0x78] sm:$0xff] %vm452, %v448
      %469 = vst.msk [vmem:[%s228 + $0x80] sm:$0xff] %vm452, %v449
      %470 = vst.msk [vmem:[%s228 + $0x88] sm:$0xff] %vm452, %v450
      %471 = vst.msk [vmem:[%s228 + $0x90] sm:$0xff] %vm452, %v451
      %s472 = smul.u32 19, %s18
      %p473 = scmp.lt.s32.totalorder %s472, 37
      %s474 = scalar_select %p473, %s472, 37
      %s475 = smul.addr %s474, 8
      %s476 = scalar_lea.vmem %s5, %s475
      // Predicated region
      $region41: #{tpu_custom_call.1} parent=39 // pred_check
        %p477 = pneg %p146
      $region42: #{tpu_custom_call.1} parent=39 // pred_check_branch
        %479 = sbr.rel (%p477) target = $region44
      $region43: #{tpu_custom_call.1} parent=39 // pred_region
        %s480 = smul.u32 19, %s18
      $region44: #{tpu_custom_call.1} parent=39 // pred_fallthru
        _
    $region40: #{tpu_custom_call.1} parent=5 // pred_fallthru
      _
    %p481 = scmp.le.s32.totalorder 2, %s13
    // Predicated region
    $region45: #{tpu_custom_call.1} parent=5 // pred_check
      %p482 = pneg %p481
    $region46: #{tpu_custom_call.1} parent=5 // pred_check_branch
      %484 = sbr.rel (%p482) target = $region48
    $region47: #{tpu_custom_call.1} parent=5 // pred_region
      %s485 = ssub.s32 %s13, 2
      // Predicated region
      $region49: #{tpu_custom_call.1} parent=47 // pred_check
        %p486 = pneg %p152
      $region50: #{tpu_custom_call.1} parent=47 // pred_check_branch
        %488 = sbr.rel (%p486) target = $region52
      $region51: #{tpu_custom_call.1} parent=47 // pred_region
        %s489 = smul.u32 19, %s19
        %p490 = scmp.lt.s32.totalorder %s489, 37
        %s491 = scalar_select %p490, %s489, 37
        %s492 = smul.addr %s491, 8
        %s493 = scalar_lea.vmem %s5, %s492
      $region52: #{tpu_custom_call.1} parent=47 // pred_fallthru
        _
    $region48: #{tpu_custom_call.1} parent=5 // pred_fallthru
      _
  $region6: #{tpu_custom_call.1} parent=0 // loop_footer
    %s17 = sadd.s32 1, %s13
  $region7: #{tpu_custom_call.1} parent=0 // loop_footer_branch
    %12 = sbr.rel target = $region3
  $region8: #{tpu_custom_call.1} parent=0 // loop_exit
    _

</llo_original>
